<compile_context>
chip_gen: v6e
topology: v6e:2x2x1
jax: 0.10.0
libtpu: 0.0.40
codegen_flags: <defaults>
</compile_context>

<pallas_src>
import math

import jax
import jax.numpy as jnp
from jax.experimental import pallas as pl
from jax.experimental.pallas import tpu as pltpu

LANES = 128
MAX_BLOCK_ROWS = 2048  # 2048 x 128 x 4 B = 1 MiB per f32 input block


def _sublane_granule(*dtypes) -> int:
    """Row multiple keeping every input's block tile-aligned (f32:8, bf16:16, int8:32)."""
    min_item = min(int(jnp.dtype(d).itemsize) for d in dtypes)
    return max(8, 32 // max(min_item, 1))


def _make_bce_kernel(smoothing: float):
    scale = 1.0 - 2.0 * float(smoothing)   # t' = s + t * (1 - 2s)  (one FMA)
    offset = float(smoothing)

    def kernel(x_ref, t_ref, acc_ref):
        i = pl.program_id(1)               # reduction steps ("arbitrary" axis)

        @pl.when(i == 0)
        def _init():
            acc_ref[...] = jnp.zeros_like(acc_ref)

        # Cast in-kernel (cheap VPU op) so the HBM streams stay in native dtype.
        x = x_ref[...].astype(jnp.float32)
        t = offset + t_ref[...].astype(jnp.float32) * scale

        # Numerically stable BCE with logits:
        #   loss = max(x, 0) - x * t + log1p(exp(-|x|))
        loss = jnp.maximum(x, 0.0) - x * t + jnp.log1p(jnp.exp(-jnp.abs(x)))

        # Pure element-wise accumulation into the resident output block; the
        # cross-lane/sublane reduction is deferred entirely to the wrapper.
        acc_ref[...] += loss

    return kernel


def label_smoothing_bce_with_logits(input, target, smoothing: float = 0.0,
                                    reduction: str = "mean"):
    """Pallas TPU implementation of LabelSmoothingBinaryCrossEntropy.forward."""
    assert 0 <= smoothing < 1, "label_smoothing value must be between 0 and 1."
    assert input.shape == target.shape
    if reduction not in ("mean", "sum"):
        # TODO(synk): reduction='none' would need an elementwise-output kernel.
        raise NotImplementedError("only 'mean' and 'sum' reductions implemented")

    n = int(math.prod(input.shape)) if input.shape else 1
    x_flat = input.reshape(-1)      # contiguous reshape: bitcast, no HBM copy
    t_flat = target.reshape(-1)

    granule = _sublane_granule(input.dtype, target.dtype)
    rows = n // LANES               # full 128-lane rows available

    loss_sum = jnp.float32(0.0)
    kernel_elems = 0

    if rows >= granule:
        # Biggest tile-aligned block that fits the data, capped at ~1 MiB/input.
        block_rows = min(MAX_BLOCK_ROWS, (rows // granule) * granule)
        nblocks = rows // block_rows                 # full blocks only
        ncores = 2 if (nblocks % 2 == 0) else 1      # v7x 2-TC split when even
        blocks_per_core = nblocks // ncores
        bulk_rows = nblocks * block_rows
        kernel_elems = bulk_rows * LANES

        x2d = x_flat[:kernel_elems].reshape(bulk_rows, LANES)
        t2d = t_flat[:kernel_elems].reshape(bulk_rows, LANES)

        in_tile = pl.BlockSpec((block_rows, LANES),
                               lambda c, i: (c * blocks_per_core + i, 0))

        # Per-core partial-sum tiles (lane-dense output, written once per core).
        partial = pl.pallas_call(
            _make_bce_kernel(float(smoothing)),
            out_shape=jax.ShapeDtypeStruct((ncores * block_rows, LANES),
                                           jnp.float32),
            grid_spec=pltpu.PrefetchScalarGridSpec(
                num_scalar_prefetch=0,
                grid=(ncores, blocks_per_core),
                in_specs=[in_tile, in_tile],
                out_specs=pl.BlockSpec((block_rows, LANES),
                                       lambda c, i: (c, 0)),
            ),
            compiler_params=pltpu.CompilerParams(
                dimension_semantics=("parallel", "arbitrary")),
        )(x2d, t2d)

        loss_sum = loss_sum + jnp.sum(partial)

    if kernel_elems < n:
        # Leftover that does not fill a whole block (and tiny inputs): plain jnp.
        xt = x_flat[kernel_elems:].astype(jnp.float32)
        tt = t_flat[kernel_elems:].astype(jnp.float32)
        tt = smoothing + tt * (1.0 - 2.0 * smoothing)
        tail = jnp.maximum(xt, 0.0) - xt * tt + jnp.log1p(jnp.exp(-jnp.abs(xt)))
        loss_sum = loss_sum + jnp.sum(tail)

    if reduction == "mean":
        return loss_sum / jnp.float32(n)
    return loss_sum


def _reference(input, target, smoothing: float, reduction: str = "mean"):
    x = input.astype(jnp.float32)
    t = target.astype(jnp.float32)
    if smoothing > 0:
        t = t * (1.0 - smoothing) + (1.0 - t) * smoothing
    loss = jnp.maximum(x, 0.0) - x * t + jnp.log1p(jnp.exp(-jnp.abs(x)))
    return jnp.mean(loss) if reduction == "mean" else jnp.sum(loss)


if __name__ == "__main__":
    key = jax.random.PRNGKey(0)
    k1, k2, k3, k4, k5, k6 = jax.random.split(key, 6)

    # 1) Small NCHW logits / binary targets, as the PyTorch module would see.
    x = jax.random.normal(k1, (2, 4, 16, 16), dtype=jnp.float32)
    t = jax.random.bernoulli(k2, 0.5, (2, 4, 16, 16)).astype(jnp.float32)
    out = jax.block_until_ready(
        label_smoothing_bce_with_logits(x, t, smoothing=0.1, reduction="mean"))
    ref = _reference(x, t, 0.1, "mean")
    assert jnp.allclose(out, ref, rtol=2e-5, atol=1e-4), (out, ref)

    # 2) Awkward shape: exercises the jnp tail path and smoothing=0 / sum.
    x2 = jax.random.normal(k3, (2, 3, 17, 19), dtype=jnp.float32)
    t2 = jax.random.bernoulli(k4, 0.5, (2, 3, 17, 19)).astype(jnp.float32)
    out2 = jax.block_until_ready(
        label_smoothing_bce_with_logits(x2, t2, smoothing=0.0, reduction="sum"))
    ref2 = _reference(x2, t2, 0.0, "sum")
    assert jnp.allclose(out2, ref2, rtol=2e-5, atol=1e-4), (out2, ref2)

    # 3) Larger map: exercises multi-block accumulation + 2-way core split.
    x3 = jax.random.normal(k5, (2, 8, 256, 256), dtype=jnp.float32)
    t3 = jax.random.bernoulli(k6, 0.5, (2, 8, 256, 256)).astype(jnp.float32)
    out3 = jax.block_until_ready(
        label_smoothing_bce_with_logits(x3, t3, smoothing=0.2, reduction="mean"))
    ref3 = _reference(x3, t3, 0.2, "mean")
    assert jnp.allclose(out3, ref3, rtol=2e-5, atol=1e-4), (out3, ref3)

    print("KERNEL_OK")
</pallas_src>

<mosaic_0001>
module attributes {stable_mosaic.version = 11 : i64} {
  func.func @kernel(%arg0: i32, %arg1: i32, %arg2: memref<16x128xf32, #tpu.memory_space<vmem>>, %arg3: memref<16x128xf32, #tpu.memory_space<vmem>>, %arg4: memref<16x128xf32, #tpu.memory_space<vmem>>) attributes {dimension_semantics = [#tpu.dimension_semantics<parallel>, #tpu.dimension_semantics<arbitrary>], iteration_bounds = array<i64: 1, 1>, scalar_prefetch = 0 : i64, scratch_operands = 0 : i64, tpu.core_type = #tpu.core_type<tc>, window_params = [{transform_indices = @transform_0, window_bounds = array<i64: 16, 128>}, {transform_indices = @transform_1, window_bounds = array<i64: 16, 128>}, {transform_indices = @transform_2, window_bounds = array<i64: 16, 128>}]} {
    %c0_i32 = arith.constant 0 : i32
    %0 = arith.cmpi eq, %arg1, %c0_i32 : i32
    %1 = arith.extui %0 : i1 to i32
    %c0_i32_0 = arith.constant 0 : i32
    %2 = arith.cmpi ne, %1, %c0_i32_0 : i32
    scf.if %2 {
      %cst_11 = arith.constant 0.000000e+00 : f32
      %22 = vector.broadcast %cst_11 : f32 to vector<16x128xf32>
      %c0_12 = arith.constant 0 : index
      %c0_13 = arith.constant 0 : index
      %23 = vector.load %arg4[%c0_12, %c0_13] : memref<16x128xf32, #tpu.memory_space<vmem>>, vector<16x128xf32>
      tpu.vector_store %arg4[%c0_12, %c0_13], %22 {strides = array<i32>} : memref<16x128xf32, #tpu.memory_space<vmem>>, vector<16x128xf32>,
    } else {
    }
    %c0 = arith.constant 0 : index
    %c0_1 = arith.constant 0 : index
    %3 = vector.load %arg2[%c0, %c0_1] : memref<16x128xf32, #tpu.memory_space<vmem>>, vector<16x128xf32>
    %c0_2 = arith.constant 0 : index
    %c0_3 = arith.constant 0 : index
    %4 = vector.load %arg3[%c0_2, %c0_3] : memref<16x128xf32, #tpu.memory_space<vmem>>, vector<16x128xf32>
    %cst = arith.constant 8.000000e-01 : f32
    %5 = vector.broadcast %cst : f32 to vector<16x128xf32>
    %6 = arith.mulf %4, %5 : vector<16x128xf32>
    %cst_4 = arith.constant 1.000000e-01 : f32
    %7 = vector.broadcast %cst_4 : f32 to vector<16x128xf32>
    %8 = arith.addf %7, %6 : vector<16x128xf32>
    %cst_5 = arith.constant 0.000000e+00 : f32
    %9 = vector.broadcast %cst_5 : f32 to vector<16x128xf32>
    %10 = arith.maximumf %3, %9 : vector<16x128xf32>
    %11 = arith.mulf %3, %8 : vector<16x128xf32>
    %12 = arith.subf %10, %11 : vector<16x128xf32>
    %13 = math.absf %3 : vector<16x128xf32>
    %cst_6 = arith.constant 0.000000e+00 : f32
    %14 = vector.broadcast %cst_6 : f32 to vector<16x128xf32>
    %15 = arith.subf %14, %13 : vector<16x128xf32>
    %16 = math.exp %15 : vector<16x128xf32>
    %17 = math.log1p %16 : vector<16x128xf32>
    %18 = arith.addf %12, %17 : vector<16x128xf32>
    %c0_7 = arith.constant 0 : index
    %c0_8 = arith.constant 0 : index
    %19 = vector.load %arg4[%c0_7, %c0_8] : memref<16x128xf32, #tpu.memory_space<vmem>>, vector<16x128xf32>
    %20 = arith.addf %19, %18 : vector<16x128xf32>
    %c0_9 = arith.constant 0 : index
    %c0_10 = arith.constant 0 : index
    %21 = vector.load %arg4[%c0_9, %c0_10] : memref<16x128xf32, #tpu.memory_space<vmem>>, vector<16x128xf32>
    tpu.vector_store %arg4[%c0_9, %c0_10], %20 {strides = array<i32>} : memref<16x128xf32, #tpu.memory_space<vmem>>, vector<16x128xf32>,
    return
  }
  func.func @transform_0(%arg0: i32, %arg1: i32) -> (i32, i32) {
    %c1_i32 = arith.constant 1 : i32
    %0 = arith.muli %arg0, %c1_i32 : i32
    %1 = arith.addi %0, %arg1 : i32
    %c0_i32 = arith.constant 0 : i32
    %c0_i32_0 = arith.constant 0 : i32
    return %1, %c0_i32 : i32, i32
  }
  func.func @transform_1(%arg0: i32, %arg1: i32) -> (i32, i32) {
    %c1_i32 = arith.constant 1 : i32
    %0 = arith.muli %arg0, %c1_i32 : i32
    %1 = arith.addi %0, %arg1 : i32
    %c0_i32 = arith.constant 0 : i32
    %c0_i32_0 = arith.constant 0 : i32
    return %1, %c0_i32 : i32, i32
  }
  func.func @transform_2(%arg0: i32, %arg1: i32) -> (i32, i32) {
    %c0_i32 = arith.constant 0 : i32
    %c0_i32_0 = arith.constant 0 : i32
    return %arg0, %c0_i32 : i32, i32
  }
}

</mosaic_0001>

<llo_original>
// kernel: tpu_custom_call.1
$region0: #{tpu_custom_call.1}
  #allocation0 [shape = 'u32[]', space=smem, size = 0x4, offset = 0x4, fixed_abs, tag = 'smem constant byte address 0x4 - core index']
  #allocation1 [shape = 'u32[144,128]{1,0:T(1,128)}', space=vmem, size = 0x12000, scoped, tag = 'internal scratch']
  %s0 = inlined_call_operand.hbm [shape: f32[16,128], index: 0, kind: input, shape index: {}]
  %s1 = inlined_call_operand.hbm [shape: f32[16,128], index: 1, kind: input, shape index: {}]
  %s2 = inlined_call_operand.hbm [shape: f32[16,128], index: 2, kind: output, shape index: {}]
  %s3 = sld [smem:[#allocation0]]
  $region30: #{tpu_custom_call.1} parent=0
    _
  %s5 = ssub.s32 1, %s3
  %s6 = scalar_select 0, %s5, %s3
  $region1: #{tpu_custom_call.1} parent=0
    #allocation2 [shape = 'u8[8192]{0}', space=vmem, size = 0x2000, scoped, tag = 'input window, operand 0, single buffered']
    #allocation3 [shape = 's32[1]{0}', space=sflag, size = 0x4, scoped, tag = 'scoped memory for tpu_custom_call.1']
    #allocation4 [shape = 's32[1]{0}', space=sflag, size = 0x4, scoped, tag = 'scoped memory for tpu_custom_call.1']
    #allocation5 [shape = 'u8[8192]{0}', space=vmem, size = 0x2000, scoped, tag = 'input window, operand 1, single buffered']
    #allocation6 [shape = 's32[1]{0}', space=sflag, size = 0x4, scoped, tag = 'scoped memory for tpu_custom_call.1']
    #allocation7 [shape = 'u8[8192]{0}', space=vmem, size = 0x2000, scoped, tag = 'output window, operand 0, single buffered']
    %7 = vsyncpa [#allocation3], 0
    %8 = vsyncpa [#allocation6], 0
    %9 = vsyncpa [#allocation4], 0
    // Predicated region
    $region2: #{tpu_custom_call.1} parent=1 // pred_check
      _
    $region3: #{tpu_custom_call.1} parent=1 // pred_check_branch
      %11 = sbr.rel (0) target = $region5
    $region4: #{tpu_custom_call.1} parent=1 // pred_region
      %s12 = sadd.s32 0, 0
      %s13 = smul.u32 2, %s12
      %s15 = ssub.s32 256, 256
      %16 = vsyncadd [#allocation3], %s15
      %s17 = smul.addr %s13, 128
      %s18 = scalar_lea.hbm %s0, %s17
      %s19 = sshll.u32 [#allocation2], 4
      %s20 = int_to_ptr.vmem [resolvable:$true] %s19
      %25 = dma.hbm_to_vmem [thread:$0]  %s18, 256, %s20, [#allocation3], 128, 128, 8
    $region5: #{tpu_custom_call.1} parent=1 // pred_fallthru
      _
    // Predicated region
    $region6: #{tpu_custom_call.1} parent=1 // pred_check
      _
    $region7: #{tpu_custom_call.1} parent=1 // pred_check_branch
      %27 = sbr.rel (0) target = $region9
    $region8: #{tpu_custom_call.1} parent=1 // pred_region
      %s28 = sadd.s32 0, 0
      %s29 = smul.u32 2, %s28
      %s31 = ssub.s32 256, 256
      %32 = vsyncadd [#allocation6], %s31
      %s33 = smul.addr %s29, 128
      %s34 = scalar_lea.hbm %s1, %s33
      %s35 = sshll.u32 [#allocation5], 4
      %s36 = int_to_ptr.vmem [resolvable:$true] %s35
      %41 = dma.hbm_to_vmem [thread:$0]  %s34, 256, %s36, [#allocation6], 128, 128, 8
    $region9: #{tpu_custom_call.1} parent=1 // pred_fallthru
      _
    // Predicated region
    $region10: #{tpu_custom_call.1} parent=1 // pred_check
      _
    $region11: #{tpu_custom_call.1} parent=1 // pred_check_branch
      %43 = sbr.rel (0) target = $region13
    $region12: #{tpu_custom_call.1} parent=1 // pred_region
      %44 = dma.done [#allocation3], 256
    $region13: #{tpu_custom_call.1} parent=1 // pred_fallthru
      _
    // Predicated region
    $region14: #{tpu_custom_call.1} parent=1 // pred_check
      _
    $region15: #{tpu_custom_call.1} parent=1 // pred_check_branch
      %46 = sbr.rel (0) target = $region17
    $region16: #{tpu_custom_call.1} parent=1 // pred_region
      %47 = dma.done [#allocation6], 256
    $region17: #{tpu_custom_call.1} parent=1 // pred_fallthru
      _
    %s48 = sadd.s32 0, 0
    %s49 = smul.u32 2, %s48
    %s50 = sadd.s32 0, 0
    %s51 = smul.u32 2, %s50
    %p52 = scmp.eq.s32.totalorder 0, 0
    // Predicated region
    $region18: #{tpu_custom_call.1} parent=1 // pred_check
      %p53 = pneg %p52
    $region19: #{tpu_custom_call.1} parent=1 // pred_check_branch
      %55 = sbr.rel (%p53) target = $region21
    $region20: #{tpu_custom_call.1} parent=1 // pred_region
      %56 = vst [vmem:[#allocation7] sm:$0xff] 0.0
      %57 = vst [vmem:[#allocation7 + $0x8] sm:$0xff] 0.0
    $region21: #{tpu_custom_call.1} parent=1 // pred_fallthru
      _
    %v58 = vld [vmem:[#allocation2] sm:$0xff]
    %v59 = vld [vmem:[#allocation2 + $0x8] sm:$0xff]
    %v60 = vld [vmem:[#allocation5] sm:$0xff]
    %v61 = vld [vmem:[#allocation5 + $0x8] sm:$0xff]
    %v62 = vmul.f32 %v60, 0.8
    %v63 = vmul.f32 %v61, 0.8
    %v64 = vadd.f32 %v62, 0.1
    %v65 = vadd.f32 %v63, 0.1
    %v66 = vmax.f32 %v58, 0.0
    %v67 = vmax.f32 %v59, 0.0
    %v68 = vmul.f32 %v58, %v64
    %v69 = vmul.f32 %v59, %v65
    %v70 = vsub.f32 %v66, %v68
    %v71 = vsub.f32 %v67, %v69
    %v72 = vand.u32 2147483647, %v58
    %v73 = vand.u32 2147483647, %v59
    %v74 = vsub.f32 0.0, %v72
    %v75 = vsub.f32 0.0, %v73
    %v76 = vmul.f32 %v74, 1.442695
    %v77 = vpow.pop %v76
    %v78 = vmul.f32 %v75, 1.442695
    %v79 = vpow.pop %v78
    %v80 = vadd.f32 %v77, 1.0
    %v81 = vlog2.pop %v80
    %v82 = vmul.f32 %v81, 0.6931472
    %v83 = vmul.f32 -0.5, %v77
    %v84 = vadd.f32 %v83, 1.0
    %v85 = vmul.f32 %v84, %v77
    %v86 = vand.u32 2147483647, %v77
    %vm87 = vcmp.lt.f32.partialorder %v86, 0.0004427343
    %v88 = vsel %vm87, %v85, %v82
    %v89 = vadd.f32 %v79, 1.0
    %v90 = vlog2.pop %v89
    %v91 = vmul.f32 %v90, 0.6931472
    %v92 = vmul.f32 -0.5, %v79
    %v93 = vadd.f32 %v92, 1.0
    %v94 = vmul.f32 %v93, %v79
    %v95 = vand.u32 2147483647, %v79
    %vm96 = vcmp.lt.f32.partialorder %v95, 0.0004427343
    %v97 = vsel %vm96, %v94, %v91
    %v98 = vadd.f32 %v70, %v88
    %v99 = vadd.f32 %v71, %v97
    %v100 = vld [vmem:[#allocation7] sm:$0xff]
    %v101 = vld [vmem:[#allocation7 + $0x8] sm:$0xff]
    %v102 = vadd.f32 %v100, %v98
    %v103 = vadd.f32 %v101, %v99
    %104 = vst [vmem:[#allocation7] sm:$0xff] %v102
    %105 = vst [vmem:[#allocation7 + $0x8] sm:$0xff] %v103
    // Predicated region
    $region22: #{tpu_custom_call.1} parent=1 // pred_check
      _
    $region23: #{tpu_custom_call.1} parent=1 // pred_check_branch
      %107 = sbr.rel (0) target = $region25
    $region24: #{tpu_custom_call.1} parent=1 // pred_region
      %s109 = ssub.s32 256, 256
      %110 = vsyncadd [#allocation4], %s109
      %s111 = sshll.u32 [#allocation7], 4
      %s112 = int_to_ptr.vmem [resolvable:$true] %s111
      %117 = dma.vmem_to_hbm [thread:$0]  %s112, 256, %s2, [#allocation4], 128, 128, 8
    $region25: #{tpu_custom_call.1} parent=1 // pred_fallthru
      _
    // Predicated region
    $region26: #{tpu_custom_call.1} parent=1 // pred_check
      _
    $region27: #{tpu_custom_call.1} parent=1 // pred_check_branch
      %119 = sbr.rel (0) target = $region29
    $region28: #{tpu_custom_call.1} parent=1 // pred_region
      %120 = dma.done [#allocation4], 256
    $region29: #{tpu_custom_call.1} parent=1 // pred_fallthru
      _
    %121 = vsyncpa [#allocation3], 1
    %122 = vsyncpa [#allocation6], 1
    %123 = vsyncpa [#allocation4], 1

</llo_original>
